<compile_context>
chip_gen: v7x
topology: tpu7x:2x2x1
jax: 0.10.0
libtpu: 0.0.40
codegen_flags: <defaults>
</compile_context>

<pallas_src>
import functools

import jax
import jax.numpy as jnp
from jax.experimental import pallas as pl
from jax.experimental.pallas import tpu as pltpu

_MIB = 1024 * 1024


# --------------------------------------------------------------------------- #
# Helpers
# --------------------------------------------------------------------------- #
def _device_kind():
    try:
        return jax.devices()[0].device_kind.lower()
    except Exception:
        return ""


def _vmem_capacity_bytes():
    try:
        return int(pltpu.get_tpu_info().vmem_capacity_bytes)
    except Exception:
        return 64 * _MIB  # conservative fallback (v7x per-TensorCore VMEM)


def _pick_row_tile(rows, row_tile):
    """Largest legal row tile <= row_tile (multiple of 8) that divides rows."""
    if rows <= row_tile:
        return rows
    if rows % row_tile == 0:
        return row_tile
    t = row_tile - (row_tile % 8)
    while t >= 8:
        if rows % t == 0:
            return t
        t -= 8
    return rows  # full-extent block is always legal


def _pick_ff_tile(d_ff, ff_tile):
    """Largest lane-aligned (multiple of 128) tile <= ff_tile dividing d_ff."""
    if d_ff <= ff_tile:
        return d_ff
    if d_ff % ff_tile == 0 and ff_tile % 128 == 0:
        return ff_tile
    t = ff_tile - (ff_tile % 128)
    while t >= 128:
        if d_ff % t == 0:
            return t
        t -= 128
    return d_ff  # no clean lane-aligned divisor: one k step over the whole d_ff


# --------------------------------------------------------------------------- #
# Kernels
# --------------------------------------------------------------------------- #
def _ffn_resident_kernel(x_ref, w1_ref, b1_ref, w2_ref, b2_ref, o_ref):
    """Whole-FFN for one row tile; W1/W2/b1/b2 stay resident in VMEM."""
    h = jnp.dot(x_ref[...], w1_ref[...], preferred_element_type=jnp.float32)
    h = jnp.maximum(h + b1_ref[...].astype(jnp.float32), 0.0)
    # TODO(synk): training-mode dropout mask would be applied to `h` here.
    acc = jnp.dot(h.astype(w2_ref.dtype), w2_ref[...],
                  preferred_element_type=jnp.float32)
    o_ref[...] = (acc + b2_ref[...].astype(jnp.float32)).astype(o_ref.dtype)


def _ffn_stream_kernel(x_ref, w1_ref, b1_ref, w2_ref, b2_ref, o_ref, acc_ref,
                       *, ff_tile):
    """One (row-tile i, d_ff-tile k) step; partial 2nd matmul into f32 scratch."""
    k = pl.program_id(1)

    @pl.when(k == 0)
    def _init():
        acc_ref[...] = jnp.zeros_like(acc_ref)

    # (tm, d_model) @ (d_model, tk) -> (tm, tk) on the MXU, f32 accumulation.
    h = jnp.dot(x_ref[...], w1_ref[...], preferred_element_type=jnp.float32)
    # b1 is resident as a single (1, d_ff) block; slice the current tk window.
    b1 = b1_ref[:, pl.ds(pl.multiple_of(k * ff_tile, ff_tile), ff_tile)]
    h = jnp.maximum(h + b1.astype(jnp.float32), 0.0)
    # Dropout: identity (eval mode).
    acc_ref[...] += jnp.dot(h.astype(w2_ref.dtype), w2_ref[...],
                            preferred_element_type=jnp.float32)

    @pl.when(k == pl.num_programs(1) - 1)
    def _finalize():
        o_ref[...] = (acc_ref[...]
                      + b2_ref[...].astype(jnp.float32)).astype(o_ref.dtype)


# --------------------------------------------------------------------------- #
# Wrapper
# --------------------------------------------------------------------------- #
def feed_forward(x, w1, b1, w2, b2, *, row_tile=None, ff_tile=None,
                 compute_dtype=None, force_stream=False):
    """x: (B, S, d_model) -> (B, S, d_model).

    Weights follow the JAX convention: W1 (d_model, d_ff), W2 (d_ff, d_model),
    equivalent to torch.nn.Linear's `x @ W.T + b` with W transposed.
    Pass bf16 x/W1/W2 (or compute_dtype=jnp.bfloat16) for native MXU
    throughput; f32 inputs still work but run the MXU in multi-pass mode.
    """
    B, S, d_model = x.shape
    d_ff = w1.shape[1]
    rows = B * S

    kind = _device_kind()
    is_v7 = ("v7" in kind) or ("7x" in kind)
    is_v5e = ("v5e" in kind) or ("v5 lite" in kind) or ("v5lite" in kind)

    # Per-generation default tiles (clamped to the problem size below).
    if row_tile is None:
        row_tile = 512                              # compute-bound on v5e/v6e/v7x
    if ff_tile is None:
        ff_tile = 512 if (is_v7 or is_v5e) else 1024

    if compute_dtype is not None:
        x = x.astype(compute_dtype)
        w1 = w1.astype(compute_dtype)
        w2 = w2.astype(compute_dtype)

    tm = _pick_row_tile(rows, row_tile)
    tk = _pick_ff_tile(d_ff, ff_tile)

    bx = jnp.dtype(x.dtype).itemsize
    bw = jnp.dtype(w1.dtype).itemsize
    bo = bx

    cap = _vmem_capacity_bytes()
    budget = int(0.85 * cap)                        # never exceed physical VMEM

    x2d = x.reshape(rows, d_model)
    b1_2d = b1.reshape(1, d_ff)
    b2_2d = b2.reshape(1, d_model)

    # ---------------- Resident-weights fast path ---------------- #
    # Grid-invariant W1/W2/b1/b2 blocks: DMA'd once, reused for every row tile.
    resident_need = (2 * d_model * d_ff * bw        # W1 + W2 (resident)
                     + (d_ff + d_model) * bw        # biases
                     + 2 * tm * d_model * bx        # x row tiles (double-buffered)
                     + 2 * tm * d_model * bo        # out row tiles
                     + tm * d_ff * 4                # hidden activation (f32)
                     + tm * d_model * 4)            # 2nd-matmul accumulator (f32)
    use_resident = (not force_stream) and resident_need <= budget

    if use_resident:
        grid = (rows // tm,)
        row_sem = (pltpu.CORE_PARALLEL
                   if (is_v7 and grid[0] % 2 == 0) else pltpu.PARALLEL)
        vmem_limit = int(min(max(2 * resident_need, 32 * _MIB), budget))
        out2d = pl.pallas_call(
            _ffn_resident_kernel,
            out_shape=jax.ShapeDtypeStruct((rows, d_model), x.dtype),
            grid_spec=pltpu.PrefetchScalarGridSpec(
                num_scalar_prefetch=0,
                grid=grid,
                in_specs=[
                    pl.BlockSpec((tm, d_model), lambda i: (i, 0)),      # x row tile
                    pl.BlockSpec((d_model, d_ff), lambda i: (0, 0)),    # W1 (resident)
                    pl.BlockSpec((1, d_ff), lambda i: (0, 0)),          # b1 (resident)
                    pl.BlockSpec((d_ff, d_model), lambda i: (0, 0)),    # W2 (resident)
                    pl.BlockSpec((1, d_model), lambda i: (0, 0)),       # b2 (resident)
                ],
                out_specs=pl.BlockSpec((tm, d_model), lambda i: (i, 0)),
            ),
            compiler_params=pltpu.CompilerParams(
                dimension_semantics=(row_sem,),
                vmem_limit_bytes=vmem_limit,
            ),
        )(x2d, w1, b1_2d, w2, b2_2d)
        return out2d.reshape(B, S, d_model)

    # ---------------- Streamed path (large FFNs) ---------------- #
    # d_ff is the innermost (reduction) grid axis; W1/W2 slabs are re-streamed
    # once per row tile, so tm stays large to keep the kernel MXU-bound.
    assert d_ff % tk == 0, "internal: ff tile must divide d_ff"
    grid = (rows // tm, d_ff // tk)
    row_sem = (pltpu.CORE_PARALLEL
               if (is_v7 and grid[0] % 2 == 0) else pltpu.PARALLEL)

    stream_need = (2 * tm * d_model * bx            # x tiles (double-buffered)
                   + 2 * tm * d_model * bo          # out tiles
                   + 2 * d_model * tk * bw          # W1 slab
                   + 2 * tk * d_model * bw          # W2 slab
                   + (d_ff + d_model) * bw          # biases (resident)
                   + tm * d_model * 4               # f32 accumulator scratch
                   + tm * tk * 4)                   # hidden activation tile (f32)
    vmem_limit = int(min(max(2 * stream_need, 32 * _MIB), budget))

    out2d = pl.pallas_call(
        functools.partial(_ffn_stream_kernel, ff_tile=tk),
        out_shape=jax.ShapeDtypeStruct((rows, d_model), x.dtype),
        grid_spec=pltpu.PrefetchScalarGridSpec(
            num_scalar_prefetch=0,
            grid=grid,
            in_specs=[
                pl.BlockSpec((tm, d_model), lambda i, k: (i, 0)),    # x row tile
                pl.BlockSpec((d_model, tk), lambda i, k: (0, k)),    # W1 column slab
                pl.BlockSpec((1, d_ff), lambda i, k: (0, 0)),        # b1 (resident)
                pl.BlockSpec((tk, d_model), lambda i, k: (k, 0)),    # W2 row slab
                pl.BlockSpec((1, d_model), lambda i, k: (0, 0)),     # b2 (resident)
            ],
            out_specs=pl.BlockSpec((tm, d_model), lambda i, k: (i, 0)),
            scratch_shapes=[pltpu.VMEM((tm, d_model), jnp.float32)],
        ),
        compiler_params=pltpu.CompilerParams(
            dimension_semantics=(row_sem, pltpu.ARBITRARY),
            vmem_limit_bytes=vmem_limit,
        ),
    )(x2d, w1, b1_2d, w2, b2_2d)
    return out2d.reshape(B, S, d_model)


# --------------------------------------------------------------------------- #
# Params / reference / demo
# --------------------------------------------------------------------------- #
def init_params(key, d_model, d_ff, dtype=jnp.float32):
    """Deterministic init mimicking nn.Linear (uniform +-1/sqrt(fan_in))."""
    k1, k2, k3, k4 = jax.random.split(key, 4)
    bound1 = 1.0 / jnp.sqrt(d_model)
    bound2 = 1.0 / jnp.sqrt(d_ff)
    w1 = jax.random.uniform(k1, (d_model, d_ff), dtype, -bound1, bound1)
    b1 = jax.random.uniform(k2, (d_ff,), dtype, -bound1, bound1)
    w2 = jax.random.uniform(k3, (d_ff, d_model), dtype, -bound2, bound2)
    b2 = jax.random.uniform(k4, (d_model,), dtype, -bound2, bound2)
    return w1, b1, w2, b2


def _reference(x, w1, b1, w2, b2):
    return jnp.maximum(x @ w1 + b1, 0.0) @ w2 + b2


if __name__ == "__main__":
    key = jax.random.PRNGKey(0)
    kx, kp, kx2, kp2 = jax.random.split(key, 4)

    # 1) Small demo shapes consistent with the module (resident-weights path).
    B, S, d_model, d_ff = 2, 8, 32, 64
    x = jax.random.normal(kx, (B, S, d_model), jnp.float32)
    w1, b1, w2, b2 = init_params(kp, d_model, d_ff)
    out = feed_forward(x, w1, b1, w2, b2)
    jax.block_until_ready(out)
    ref = _reference(x, w1, b1, w2, b2)
    assert out.shape == (B, S, d_model)
    assert jnp.allclose(out, ref, atol=1e-5, rtol=1e-5)

    # 2) Also exercise the streamed (d_ff-reduction) path with small tiles.
    B2, S2, d_model2, d_ff2 = 2, 64, 128, 512
    x2 = jax.random.normal(kx2, (B2, S2, d_model2), jnp.float32)
    w1b, b1b, w2b, b2b = init_params(kp2, d_model2, d_ff2)
    out2 = feed_forward(x2, w1b, b1b, w2b, b2b,
                        row_tile=64, ff_tile=128, force_stream=True)
    jax.block_until_ready(out2)
    ref2 = _reference(x2, w1b, b1b, w2b, b2b)
    assert out2.shape == (B2, S2, d_model2)
    assert jnp.allclose(out2, ref2, atol=1e-4, rtol=1e-4)

    print("KERNEL_OK")
</pallas_src>

<mosaic_0001>
module attributes {stable_mosaic.version = 11 : i64} {
  func.func @_ffn_resident_kernel(%arg0: i32, %arg1: memref<16x32xf32, #tpu.memory_space<vmem>>, %arg2: memref<32x64xf32, #tpu.memory_space<vmem>>, %arg3: memref<1x64xf32, #tpu.memory_space<vmem>>, %arg4: memref<64x32xf32, #tpu.memory_space<vmem>>, %arg5: memref<1x32xf32, #tpu.memory_space<vmem>>, %arg6: memref<16x32xf32, #tpu.memory_space<vmem>>) attributes {dimension_semantics = [#tpu.dimension_semantics<parallel>], iteration_bounds = array<i64: 1>, scalar_prefetch = 0 : i64, scratch_operands = 0 : i64, tpu.core_type = #tpu.core_type<tc>, window_params = [{transform_indices = @transform_0, window_bounds = array<i64: 16, 32>}, {pipeline_mode = #tpu.pipeline_mode<synchronous>, transform_indices = @transform_1, window_bounds = array<i64: 32, 64>}, {pipeline_mode = #tpu.pipeline_mode<synchronous>, transform_indices = @transform_2, window_bounds = array<i64: 1, 64>}, {pipeline_mode = #tpu.pipeline_mode<synchronous>, transform_indices = @transform_3, window_bounds = array<i64: 64, 32>}, {pipeline_mode = #tpu.pipeline_mode<synchronous>, transform_indices = @transform_4, window_bounds = array<i64: 1, 32>}, {transform_indices = @transform_5, window_bounds = array<i64: 16, 32>}]} {
    %c0 = arith.constant 0 : index
    %c0_0 = arith.constant 0 : index
    %0 = vector.load %arg1[%c0, %c0_0] : memref<16x32xf32, #tpu.memory_space<vmem>>, vector<16x32xf32>
    %c0_1 = arith.constant 0 : index
    %c0_2 = arith.constant 0 : index
    %1 = vector.load %arg2[%c0_1, %c0_2] : memref<32x64xf32, #tpu.memory_space<vmem>>, vector<32x64xf32>
    %cst = arith.constant dense<0.000000e+00> : vector<16x64xf32>
    %2 = tpu.matmul %0, %1, %cst {dimension_numbers = #tpu.dot_dimension_numbers<[1], [0], [0], [1], [0, 0, 1, 1], [], []>} : vector<16x32xf32>, vector<32x64xf32>, vector<16x64xf32> -> vector<16x64xf32>
    %c0_3 = arith.constant 0 : index
    %c0_4 = arith.constant 0 : index
    %3 = vector.load %arg3[%c0_3, %c0_4] : memref<1x64xf32, #tpu.memory_space<vmem>>, vector<1x64xf32>
    %4 = vector.broadcast %3 : vector<1x64xf32> to vector<16x64xf32>
    %5 = arith.addf %2, %4 : vector<16x64xf32>
    %cst_5 = arith.constant 0.000000e+00 : f32
    %6 = vector.broadcast %cst_5 : f32 to vector<16x64xf32>
    %7 = arith.maximumf %5, %6 : vector<16x64xf32>
    %c0_6 = arith.constant 0 : index
    %c0_7 = arith.constant 0 : index
    %8 = vector.load %arg4[%c0_6, %c0_7] : memref<64x32xf32, #tpu.memory_space<vmem>>, vector<64x32xf32>
    %cst_8 = arith.constant dense<0.000000e+00> : vector<16x32xf32>
    %9 = tpu.matmul %7, %8, %cst_8 {dimension_numbers = #tpu.dot_dimension_numbers<[1], [0], [0], [1], [0, 0, 1, 1], [], []>} : vector<16x64xf32>, vector<64x32xf32>, vector<16x32xf32> -> vector<16x32xf32>
    %c0_9 = arith.constant 0 : index
    %c0_10 = arith.constant 0 : index
    %10 = vector.load %arg5[%c0_9, %c0_10] : memref<1x32xf32, #tpu.memory_space<vmem>>, vector<1x32xf32>
    %11 = vector.broadcast %10 : vector<1x32xf32> to vector<16x32xf32>
    %12 = arith.addf %9, %11 : vector<16x32xf32>
    %c0_11 = arith.constant 0 : index
    %c0_12 = arith.constant 0 : index
    %13 = vector.load %arg6[%c0_11, %c0_12] : memref<16x32xf32, #tpu.memory_space<vmem>>, vector<16x32xf32>
    tpu.vector_store %arg6[%c0_11, %c0_12], %12 {strides = array<i32>} : memref<16x32xf32, #tpu.memory_space<vmem>>, vector<16x32xf32>,
    return
  }
  func.func @transform_0(%arg0: i32) -> (i32, i32) {
    %c0_i32 = arith.constant 0 : i32
    %c0_i32_0 = arith.constant 0 : i32
    return %arg0, %c0_i32 : i32, i32
  }
  func.func @transform_1(%arg0: i32) -> (i32, i32) {
    %c0_i32 = arith.constant 0 : i32
    %c0_i32_0 = arith.constant 0 : i32
    %c0_i32_1 = arith.constant 0 : i32
    return %c0_i32, %c0_i32_0 : i32, i32
  }
  func.func @transform_2(%arg0: i32) -> (i32, i32) {
    %c0_i32 = arith.constant 0 : i32
    %c0_i32_0 = arith.constant 0 : i32
    %c0_i32_1 = arith.constant 0 : i32
    return %c0_i32, %c0_i32_0 : i32, i32
  }
  func.func @transform_3(%arg0: i32) -> (i32, i32) {
    %c0_i32 = arith.constant 0 : i32
    %c0_i32_0 = arith.constant 0 : i32
    %c0_i32_1 = arith.constant 0 : i32
    return %c0_i32, %c0_i32_0 : i32, i32
  }
  func.func @transform_4(%arg0: i32) -> (i32, i32) {
    %c0_i32 = arith.constant 0 : i32
    %c0_i32_0 = arith.constant 0 : i32
    %c0_i32_1 = arith.constant 0 : i32
    return %c0_i32, %c0_i32_0 : i32, i32
  }
  func.func @transform_5(%arg0: i32) -> (i32, i32) {
    %c0_i32 = arith.constant 0 : i32
    %c0_i32_0 = arith.constant 0 : i32
    return %arg0, %c0_i32 : i32, i32
  }
}

</mosaic_0001>

<llo_original>
// kernel: tpu_custom_call.1
$region0: #{tpu_custom_call.1}
  #allocation0 [shape = 'u32[]', space=smem, size = 0x4, offset = 0x4, fixed_abs, tag = 'smem constant byte address 0x4 - core index']
  #allocation1 [shape = 'u32[144,128]{1,0:T(1,128)}', space=vmem, size = 0x12000, scoped, tag = 'internal scratch']
  %s0 = inlined_call_operand.vmem [shape: f32[16,32], index: 0, kind: input, shape index: {}]
  %s1 = inlined_call_operand.vmem [shape: f32[32,64], index: 1, kind: input, shape index: {}]
  %s2 = inlined_call_operand.vmem [shape: f32[1,64], index: 2, kind: input, shape index: {}]
  %s3 = inlined_call_operand.vmem [shape: f32[64,32], index: 3, kind: input, shape index: {}]
  %s4 = inlined_call_operand.vmem [shape: f32[1,32], index: 4, kind: input, shape index: {}]
  %s5 = inlined_call_operand.hbm [shape: f32[16,32], index: 5, kind: output, shape index: {}]
  %s6 = sld [smem:[#allocation0]]
  $region30: #{tpu_custom_call.1} parent=0
    _
  %s8 = ssub.s32 1, %s6
  %s9 = scalar_select 0, %s8, %s6
  $region1: #{tpu_custom_call.1} parent=0
    #allocation2 [shape = 'u8[8192]{0}', space=vmem, size = 0x2000, scoped, tag = 'output window, operand 0, single buffered']
    #allocation3 [shape = 's32[1]{0}', space=sflag, size = 0x4, scoped, tag = 'scoped memory for tpu_custom_call.1']
    %10 = vsyncpa [#allocation3], 0
    // Predicated region
    $region2: #{tpu_custom_call.1} parent=1 // pred_check
      _
    $region3: #{tpu_custom_call.1} parent=1 // pred_check_branch
      %12 = sbr.rel (0) target = $region5
    $region4: #{tpu_custom_call.1} parent=1 // pred_region
      _
    $region5: #{tpu_custom_call.1} parent=1 // pred_fallthru
      _
    // Predicated region
    $region6: #{tpu_custom_call.1} parent=1 // pred_check
      _
    $region7: #{tpu_custom_call.1} parent=1 // pred_check_branch
      %14 = sbr.rel (0) target = $region9
    $region8: #{tpu_custom_call.1} parent=1 // pred_region
      _
    $region9: #{tpu_custom_call.1} parent=1 // pred_fallthru
      _
    // Predicated region
    $region10: #{tpu_custom_call.1} parent=1 // pred_check
      _
    $region11: #{tpu_custom_call.1} parent=1 // pred_check_branch
      %16 = sbr.rel (0) target = $region13
    $region12: #{tpu_custom_call.1} parent=1 // pred_region
      _
    $region13: #{tpu_custom_call.1} parent=1 // pred_fallthru
      _
    // Predicated region
    $region14: #{tpu_custom_call.1} parent=1 // pred_check
      _
    $region15: #{tpu_custom_call.1} parent=1 // pred_check_branch
      %18 = sbr.rel (0) target = $region17
    $region16: #{tpu_custom_call.1} parent=1 // pred_region
      _
    $region17: #{tpu_custom_call.1} parent=1 // pred_fallthru
      _
    // Predicated region
    $region18: #{tpu_custom_call.1} parent=1 // pred_check
      _
    $region19: #{tpu_custom_call.1} parent=1 // pred_check_branch
      %20 = sbr.rel (0) target = $region21
    $region20: #{tpu_custom_call.1} parent=1 // pred_region
      _
    $region21: #{tpu_custom_call.1} parent=1 // pred_fallthru
      _
    %v21 = vld [vmem:[%s0] sm:$0xff]
    %v22 = vld [vmem:[%s0 + $0x8] sm:$0xff]
    %v23 = vld [vmem:[%s1] sm:$0xff]
    %v24 = vld [vmem:[%s1 + $0x8] sm:$0xff]
    %v25 = vld [vmem:[%s1 + $0x10] sm:$0xff]
    %v26 = vld [vmem:[%s1 + $0x18] sm:$0xff]
    %v27 = vld [vmem:[%s2] sm:$0x1]
    %v29 = vlaneseq
    %v30 = vshrl.u32 %v29, 7
    %v31 = vsub.s32 0, %v30
    %v32 = vrot.slane %v27, %v31
    %vm34 = vcmask 261120
    %v36 = vsel %vm34, %v21, 0
    %v39 = vsel %vm34, %v22, 0
    %41 = vmatprep.subr.mxu0 0.0
    %42 = vmatpush1.msra.mxu0 %v23
    %43 = vmatprep.subr.mxu0 0.0
    %44 = vmatpush1.msra.mxu0 %v24
    %45 = vmatprep.subr.mxu0 0.0
    %46 = vmatpush1.msra.mxu0 %v25
    %47 = vmatprep.subr.mxu0 0.0
    %48 = vmatpush1.msra.mxu0 %v26
    %49 = vmatprep.subr.mxu0 0.0
    %50 = vmatpush1.msra.mxu0 0.0
    %51 = vmatprep.subr.mxu0 0.0
    %52 = vmatpush1.msra.mxu0 0.0
    %53 = vmatprep.subr.mxu0 0.0
    %54 = vmatpush1.msra.mxu0 0.0
    %55 = vmatprep.subr.mxu0 0.0
    %56 = vmatpush1.msra.mxu0 0.0
    %57 = vmatprep.subr.mxu0 0.0
    %58 = vmatpush1.msra.mxu0 0.0
    %59 = vmatprep.subr.mxu0 0.0
    %60 = vmatpush1.msra.mxu0 0.0
    %61 = vmatprep.subr.mxu0 0.0
    %62 = vmatpush1.msra.mxu0 0.0
    %63 = vmatprep.subr.mxu0 0.0
    %64 = vmatpush1.msra.mxu0 0.0
    %65 = vmatprep.subr.mxu0 0.0
    %66 = vmatpush1.msra.mxu0 0.0
    %67 = vmatprep.subr.mxu0 0.0
    %68 = vmatpush1.msra.mxu0 0.0
    %69 = vmatprep.subr.mxu0 0.0
    %70 = vmatpush1.msra.mxu0 0.0
    %71 = vmatprep.subr.mxu0 0.0
    %72 = vmatpush1.msra.mxu0 0.0
    %73 = vmatprep.subr.mxu0 0.0
    %74 = vmatpush1.msra.mxu0 0.0
    %75 = vmatprep.subr.mxu0 0.0
    %76 = vmatpush1.msra.mxu0 0.0
    %77 = vmatprep.subr.mxu0 0.0
    %78 = vmatpush1.msra.mxu0 0.0
    %79 = vmatprep.subr.mxu0 0.0
    %80 = vmatpush1.msra.mxu0 0.0
    %81 = vmatprep.subr.mxu0 0.0
    %82 = vmatpush1.msra.mxu0 0.0
    %83 = vmatprep.subr.mxu0 0.0
    %84 = vmatpush1.msra.mxu0 0.0
    %85 = vmatprep.subr.mxu0 0.0
    %86 = vmatpush1.msra.mxu0 0.0
    %87 = vmatprep.subr.mxu0 0.0
    %88 = vmatpush1.msra.mxu0 0.0
    %89 = vmatprep.subr.mxu0 0.0
    %90 = vmatpush1.msra.mxu0 0.0
    %91 = vmatprep.subr.mxu0 0.0
    %92 = vmatpush1.msra.mxu0 0.0
    %93 = vmatprep.subr.mxu0 0.0
    %94 = vmatpush1.msra.mxu0 0.0
    %95 = vmatprep.subr.mxu0 0.0
    %96 = vmatpush1.msra.mxu0 0.0
    %97 = vmatprep.subr.mxu0 0.0
    %98 = vmatpush1.msra.mxu0 0.0
    %99 = vmatprep.subr.mxu0 0.0
    %100 = vmatpush1.msra.mxu0 0.0
    %101 = vmatprep.subr.mxu0 0.0
    %102 = vmatpush1.msra.mxu0 0.0
    %103 = vmatprep.subr.mxu0 0.0
    %104 = vmatpush1.msra.mxu0 0.0
    %105 = vmatprep.mubr.f32.mxu0 0.0
    %106 = vmatmul.mubr.f32.gmra.mrb[0].mxu0 %v36
    %v107 = vpop.f32.mrb[0].mxu0
    %v108 = vadd.f32 %v32, %v107
    %v109 = vpop.f32.mrb[0].mxu0
    %110 = vmatprep.mubr.f32.mxu0 0.0
    %111 = vmatmul.mubr.f32.gmra.mrb[0].mxu0 %v39
    %v112 = vpop.f32.mrb[0].mxu0
    %v113 = vadd.f32 %v32, %v112
    %v114 = vpop.f32.mrb[0].mxu0
    %115 = vdwg.mxu0
    %v116 = vmax.f32 %v108, 0.0
    %v117 = vmax.f32 %v113, 0.0
    %v118 = vld [vmem:[%s3] sm:$0xff]
    %v119 = vld [vmem:[%s3 + $0x8] sm:$0xff]
    %v120 = vld [vmem:[%s3 + $0x10] sm:$0xff]
    %v121 = vld [vmem:[%s3 + $0x18] sm:$0xff]
    %v122 = vld [vmem:[%s3 + $0x20] sm:$0xff]
    %v123 = vld [vmem:[%s3 + $0x28] sm:$0xff]
    %v124 = vld [vmem:[%s3 + $0x30] sm:$0xff]
    %v125 = vld [vmem:[%s3 + $0x38] sm:$0xff]
    %v126 = vld [vmem:[%s4] sm:$0x1]
    %v128 = vlaneseq
    %v129 = vshrl.u32 %v128, 7
    %v130 = vsub.s32 0, %v129
    %v131 = vrot.slane %v126, %v130
    %vm133 = vcmask 523264
    %v135 = vsel %vm133, %v116, 0
    %v138 = vsel %vm133, %v117, 0
    %140 = vmatprep.subr.mxu0 0.0
    %141 = vmatpush1.msra.mxu0 %v118
    %142 = vmatprep.subr.mxu0 0.0
    %143 = vmatpush1.msra.mxu0 %v119
    %144 = vmatprep.subr.mxu0 0.0
    %145 = vmatpush1.msra.mxu0 %v120
    %146 = vmatprep.subr.mxu0 0.0
    %147 = vmatpush1.msra.mxu0 %v121
    %148 = vmatprep.subr.mxu0 0.0
    %149 = vmatpush1.msra.mxu0 %v122
    %150 = vmatprep.subr.mxu0 0.0
    %151 = vmatpush1.msra.mxu0 %v123
    %152 = vmatprep.subr.mxu0 0.0
    %153 = vmatpush1.msra.mxu0 %v124
    %154 = vmatprep.subr.mxu0 0.0
    %155 = vmatpush1.msra.mxu0 %v125
    %156 = vmatprep.subr.mxu0 0.0
    %157 = vmatpush1.msra.mxu0 0.0
    %158 = vmatprep.subr.mxu0 0.0
    %159 = vmatpush1.msra.mxu0 0.0
    %160 = vmatprep.subr.mxu0 0.0
    %161 = vmatpush1.msra.mxu0 0.0
    %162 = vmatprep.subr.mxu0 0.0
    %163 = vmatpush1.msra.mxu0 0.0
    %164 = vmatprep.subr.mxu0 0.0
    %165 = vmatpush1.msra.mxu0 0.0
    %166 = vmatprep.subr.mxu0 0.0
    %167 = vmatpush1.msra.mxu0 0.0
    %168 = vmatprep.subr.mxu0 0.0
    %169 = vmatpush1.msra.mxu0 0.0
    %170 = vmatprep.subr.mxu0 0.0
    %171 = vmatpush1.msra.mxu0 0.0
    %172 = vmatprep.subr.mxu0 0.0
    %173 = vmatpush1.msra.mxu0 0.0
    %174 = vmatprep.subr.mxu0 0.0
    %175 = vmatpush1.msra.mxu0 0.0
    %176 = vmatprep.subr.mxu0 0.0
    %177 = vmatpush1.msra.mxu0 0.0
    %178 = vmatprep.subr.mxu0 0.0
    %179 = vmatpush1.msra.mxu0 0.0
    %180 = vmatprep.subr.mxu0 0.0
    %181 = vmatpush1.msra.mxu0 0.0
    %182 = vmatprep.subr.mxu0 0.0
    %183 = vmatpush1.msra.mxu0 0.0
    %184 = vmatprep.subr.mxu0 0.0
    %185 = vmatpush1.msra.mxu0 0.0
    %186 = vmatprep.subr.mxu0 0.0
    %187 = vmatpush1.msra.mxu0 0.0
    %188 = vmatprep.subr.mxu0 0.0
    %189 = vmatpush1.msra.mxu0 0.0
    %190 = vmatprep.subr.mxu0 0.0
    %191 = vmatpush1.msra.mxu0 0.0
    %192 = vmatprep.subr.mxu0 0.0
    %193 = vmatpush1.msra.mxu0 0.0
    %194 = vmatprep.subr.mxu0 0.0
    %195 = vmatpush1.msra.mxu0 0.0
    %196 = vmatprep.subr.mxu0 0.0
    %197 = vmatpush1.msra.mxu0 0.0
    %198 = vmatprep.subr.mxu0 0.0
    %199 = vmatpush1.msra.mxu0 0.0
    %200 = vmatprep.subr.mxu0 0.0
    %201 = vmatpush1.msra.mxu0 0.0
    %202 = vmatprep.subr.mxu0 0.0
    %203 = vmatpush1.msra.mxu0 0.0
    %204 = vmatprep.mubr.f32.mxu0 0.0
    %205 = vmatmul.mubr.f32.gmra.mrb[0].mxu0 %v135
    %v206 = vpop.f32.mrb[0].mxu0
    %v207 = vadd.f32 %v131, %v206
    %v208 = vpop.f32.mrb[0].mxu0
    %209 = vmatprep.mubr.f32.mxu0 0.0
    %210 = vmatmul.mubr.f32.gmra.mrb[0].mxu0 %v138
    %v211 = vpop.f32.mrb[0].mxu0
    %v212 = vadd.f32 %v131, %v211
    %v213 = vpop.f32.mrb[0].mxu0
    %214 = vdwg.mxu0
    %215 = vst.msk [vmem:[#allocation2] sm:$0xff] %vm34, %v207
    %216 = vst.msk [vmem:[#allocation2 + $0x8] sm:$0xff] %vm34, %v212
    // Predicated region
    $region22: #{tpu_custom_call.1} parent=1 // pred_check
      _
    $region23: #{tpu_custom_call.1} parent=1 // pred_check_branch
      %218 = sbr.rel (0) target = $region25
    $region24: #{tpu_custom_call.1} parent=1 // pred_region
      %s220 = ssub.s32 256, 256
      %221 = vsyncadd [#allocation3], %s220
      %s222 = sshll.u32 [#allocation2], 4
      %s223 = int_to_ptr.vmem [resolvable:$true] %s222
      %228 = dma.vmem_to_hbm [thread:$0]  %s223, 256, %s5, [#allocation3], 128, 128, 8
    $region25: #{tpu_custom_call.1} parent=1 // pred_fallthru
      _
    // Predicated region
    $region26: #{tpu_custom_call.1} parent=1 // pred_check
      _
    $region27: #{tpu_custom_call.1} parent=1 // pred_check_branch
      %230 = sbr.rel (0) target = $region29
    $region28: #{tpu_custom_call.1} parent=1 // pred_region
      %231 = dma.done [#allocation3], 256
    $region29: #{tpu_custom_call.1} parent=1 // pred_fallthru
      _
    %232 = vsyncpa [#allocation3], 1

</llo_original>
